<compile_context>
chip_gen: v6e
topology: v6e:2x2x1
jax: 0.10.0
libtpu: 0.0.40
codegen_flags: <defaults>
</compile_context>

<pallas_src>
import jax
import jax.numpy as jnp
from jax import lax
from jax.experimental import pallas as pl
from jax.experimental.pallas import tpu as pltpu

EPS = 1e-5

_TILE_CANDIDATES = (8192, 6272, 4096, 3584, 3136, 2048, 1792, 1568, 1280,
                    1024, 896, 768, 640, 512, 448, 384, 256, 128)


def _pick_tile(hw: int) -> int:
    """Largest lane-dense (multiple-of-128) tile that divides H*W, else full extent."""
    for t in _TILE_CANDIDATES:
        if hw % t == 0:
            return t
    return hw  # full-extent block is always legal


# --------------------------- pass 1: input statistics ---------------------------

def _stats_kernel(x_ref, s_ref, g_ref):
    # x_ref: [1, Cin, T] f32 activation tile (NCHW-native).
    # Outputs are resident accumulators (one block per parallel partition):
    #   s_ref [1, Cin, 1]   = sum over spatial of x
    #   g_ref [1, Cin, Cin] = x @ x^T  (Gram matrix, long-K MXU matmul)
    @pl.when(pl.program_id(1) == 0)
    def _init():
        s_ref[...] = jnp.zeros_like(s_ref)
        g_ref[...] = jnp.zeros_like(g_ref)

    x = x_ref[0]                                                    # [Cin, T] f32
    xb = x.astype(jnp.bfloat16)                                     # bf16 MXU operand
    s_ref[0] += jnp.sum(x, axis=1, keepdims=True)
    g_ref[0] += lax.dot_general(xb, xb, (((1,), (1,)), ((), ())),
                                preferred_element_type=jnp.float32)


# --------------------- pass 2: conv with folded BN affine ---------------------

def _norm_kernel(x_ref, ws_ref, shift_ref, o_ref):
    # o = W' @ x + shift, with W' = W * (gamma / sqrt(var + eps)) pre-folded.
    xb = x_ref[0].astype(jnp.bfloat16)                              # [Cin, T]
    y = jnp.dot(ws_ref[...], xb, preferred_element_type=jnp.float32)  # [Cout, T] f32
    o_ref[0] = (y + shift_ref[...]).astype(o_ref.dtype)


# ------------------ fused small-input fast path (x stays in VMEM) ------------------

def _fused_kernel(x_ref, w_ref, gamma_ref, beta_ref, o_ref):
    n_batch, c_in, hw = x_ref.shape
    w = w_ref[...]                                                  # [Cout, Cin] f32

    # Stats over all n (x read from HBM exactly once).
    s_x = jnp.zeros((c_in, 1), jnp.float32)
    gram = jnp.zeros((c_in, c_in), jnp.float32)
    for n in range(n_batch):                                        # static, small
        x_n = x_ref[n]                                              # [Cin, HW]
        xb = x_n.astype(jnp.bfloat16)
        s_x = s_x + jnp.sum(x_n, axis=1, keepdims=True)
        gram = gram + lax.dot_general(xb, xb, (((1,), (1,)), ((), ())),
                                      preferred_element_type=jnp.float32)

    m = jnp.float32(n_batch * hw)
    sum_y = jnp.dot(w, s_x, preferred_element_type=jnp.float32)      # [Cout, 1]
    sumsq_y = jnp.sum(jnp.dot(w, gram, preferred_element_type=jnp.float32) * w,
                      axis=1, keepdims=True)                         # [Cout, 1]
    mean = sum_y / m
    var = jnp.maximum(sumsq_y / m - mean * mean, 0.0)                # biased (training)
    inv_std = lax.rsqrt(var + EPS)
    scale = gamma_ref[...] * inv_std
    shift = beta_ref[...] - mean * scale
    w_s = (w * scale).astype(jnp.bfloat16)                           # fold BN scale into W

    for n in range(n_batch):
        xb = x_ref[n].astype(jnp.bfloat16)
        y = jnp.dot(w_s, xb, preferred_element_type=jnp.float32)     # [Cout, HW]
        o_ref[n] = (y + shift).astype(o_ref.dtype)


# ----------------------------------- wrapper -----------------------------------

def conv1x1_batchnorm(x_nchw, weight, gamma, beta, *, force_two_pass=False):
    """x_nchw: [N,Cin,H,W]; weight: [Cout,Cin,1,1]; gamma/beta: [Cout].

    Conv2d(1x1, no bias) followed by training-mode BatchNorm2d, NCHW output.
    """
    N, Cin, H, W = x_nchw.shape
    Cout = weight.shape[0]
    HW = H * W
    M = N * HW

    # NCHW-native: only free reshapes, no transposes.
    x3 = x_nchw.reshape(N, Cin, HW).astype(jnp.float32)
    w2 = weight.reshape(Cout, Cin).astype(jnp.float32)
    gamma2 = gamma.reshape(Cout, 1).astype(jnp.float32)
    beta2 = beta.reshape(Cout, 1).astype(jnp.float32)

    # TODO(synk): running_mean/running_var buffer updates (momentum=0.1) are
    # module state, not part of the returned tensor, and are not materialized.

    x_bytes = N * Cin * HW * 4
    out_bytes = N * Cout * HW * 4
    fused_fits = (2 * x_bytes + 3 * out_bytes + x_bytes // 2) <= 24 * 1024 * 1024

    if fused_fits and not force_two_pass:
        # ---- single-call path: x resident in VMEM, one HBM read of x --------
        out3 = pl.pallas_call(
            _fused_kernel,
            out_shape=jax.ShapeDtypeStruct((N, Cout, HW), jnp.float32),
            grid_spec=pltpu.PrefetchScalarGridSpec(
                num_scalar_prefetch=0,
                grid=(1,),
                in_specs=[pl.BlockSpec((N, Cin, HW), lambda i: (0, 0, 0)),
                          pl.BlockSpec((Cout, Cin), lambda i: (0, 0)),
                          pl.BlockSpec((Cout, 1), lambda i: (0, 0)),
                          pl.BlockSpec((Cout, 1), lambda i: (0, 0))],
                out_specs=pl.BlockSpec((N, Cout, HW), lambda i: (0, 0, 0)),
            ),
            compiler_params=pltpu.CompilerParams(
                dimension_semantics=("arbitrary",),
                vmem_limit_bytes=48 * 1024 * 1024,
            ),
            cost_estimate=pl.CostEstimate(
                flops=2 * M * Cin * Cin + 2 * M * Cin * Cout + 2 * M * Cout,
                transcendentals=Cout,
                bytes_accessed=(M * Cin + M * Cout + Cout * Cin + 2 * Cout) * 4,
            ),
        )(x3, w2, gamma2, beta2)
        return out3.reshape(N, Cout, H, W)

    # -------------------- two-pass tiled path (large inputs) --------------------
    tile = _pick_tile(HW)
    n_t = HW // tile                       # spatial tiles per image
    total = N * n_t                        # total (n, tile) steps
    P = 2 if total % 2 == 0 else 1         # parallel partitions (megacore on v7x)
    steps = total // P

    def x_map(p, s):
        flat = p * steps + s
        return (flat // n_t, 0, flat % n_t)

    # ---- pass 1: stream x once, accumulate s_x and the Gram matrix ----------
    s_x_p, gram_p = pl.pallas_call(
        _stats_kernel,
        out_shape=(jax.ShapeDtypeStruct((P, Cin, 1), jnp.float32),
                   jax.ShapeDtypeStruct((P, Cin, Cin), jnp.float32)),
        grid_spec=pltpu.PrefetchScalarGridSpec(
            num_scalar_prefetch=0,
            grid=(P, steps),
            in_specs=[pl.BlockSpec((1, Cin, tile), x_map)],
            out_specs=(pl.BlockSpec((1, Cin, 1), lambda p, s: (p, 0, 0)),
                       pl.BlockSpec((1, Cin, Cin), lambda p, s: (p, 0, 0))),
        ),
        compiler_params=pltpu.CompilerParams(
            dimension_semantics=("parallel", "arbitrary"),
            vmem_limit_bytes=32 * 1024 * 1024,
        ),
        cost_estimate=pl.CostEstimate(
            flops=2 * M * Cin * Cin + M * Cin,
            transcendentals=0,
            bytes_accessed=M * Cin * 4 + P * (Cin + Cin * Cin) * 4,
        ),
    )(x3)

    # ---- fold batch stats + affine into per-channel W' / shift (tiny, in JAX) ----
    s_x = jnp.sum(s_x_p, axis=0)                                    # [Cin, 1]
    gram = jnp.sum(gram_p, axis=0)                                  # [Cin, Cin]
    hi = lax.Precision.HIGHEST
    sum_y = jnp.dot(w2, s_x, precision=hi)                          # [Cout, 1]
    sumsq_y = jnp.sum(jnp.dot(w2, gram, precision=hi) * w2, axis=1, keepdims=True)
    mean = sum_y / jnp.float32(M)
    var = jnp.maximum(sumsq_y / jnp.float32(M) - mean * mean, 0.0)  # biased (training)
    inv_std = lax.rsqrt(var + EPS)
    scale = gamma2 * inv_std
    shift = beta2 - mean * scale
    w_scaled = (w2 * scale).astype(jnp.bfloat16)                    # BN scale folded into W

    # ---- pass 2: o = W' @ x + shift, lane-dense f32 stores -------------------
    out3 = pl.pallas_call(
        _norm_kernel,
        out_shape=jax.ShapeDtypeStruct((N, Cout, HW), jnp.float32),
        grid_spec=pltpu.PrefetchScalarGridSpec(
            num_scalar_prefetch=0,
            grid=(N, n_t),
            in_specs=[pl.BlockSpec((1, Cin, tile), lambda n, t: (n, 0, t)),
                      pl.BlockSpec((Cout, Cin), lambda n, t: (0, 0)),
                      pl.BlockSpec((Cout, 1), lambda n, t: (0, 0))],
            out_specs=pl.BlockSpec((1, Cout, tile), lambda n, t: (n, 0, t)),
        ),
        compiler_params=pltpu.CompilerParams(
            dimension_semantics=("parallel", "parallel"),
            vmem_limit_bytes=32 * 1024 * 1024,
        ),
        cost_estimate=pl.CostEstimate(
            flops=2 * M * Cin * Cout + M * Cout,
            transcendentals=0,
            bytes_accessed=(M * Cin + M * Cout + Cout * Cin + Cout) * 4,
        ),
    )(x3, w_scaled, shift)

    return out3.reshape(N, Cout, H, W)


def _reference(x_nchw, weight, gamma, beta):
    # Pure-JAX reference (training-mode BN with biased variance).
    N, Cin, H, W = x_nchw.shape
    Cout = weight.shape[0]
    w2 = weight.reshape(Cout, Cin)
    y = jnp.einsum("nchw,oc->nohw", x_nchw, w2)
    mean = jnp.mean(y, axis=(0, 2, 3), keepdims=True)
    var = jnp.mean((y - mean) ** 2, axis=(0, 2, 3), keepdims=True)
    yn = (y - mean) * lax.rsqrt(var + EPS)
    return yn * gamma.reshape(1, Cout, 1, 1) + beta.reshape(1, Cout, 1, 1)


if __name__ == "__main__":
    key = jax.random.PRNGKey(0)
    k_x, k_w, k_g, k_b = jax.random.split(key, 4)

    # Small shapes consistent with the module (channels 16 -> 96).
    N, Cin, H, W, Cout = 2, 16, 16, 16, 96
    x = jax.random.normal(k_x, (N, Cin, H, W), dtype=jnp.float32)
    weight = jax.random.normal(k_w, (Cout, Cin, 1, 1), dtype=jnp.float32) * (1.0 / jnp.sqrt(Cin))
    gamma = 1.0 + 0.1 * jax.random.normal(k_g, (Cout,), dtype=jnp.float32)
    beta = 0.1 * jax.random.normal(k_b, (Cout,), dtype=jnp.float32)

    # References:
    #  (a) exact f32 module semantics,
    #  (b) same math with x / w pre-rounded to bf16 -- i.e. the operands the
    #      kernel feeds the MXU (standard TPU matmul behavior).
    ref_f32 = _reference(x, weight, gamma, beta)
    ref_bf16 = _reference(x.astype(jnp.bfloat16).astype(jnp.float32),
                          weight.astype(jnp.bfloat16).astype(jnp.float32),
                          gamma, beta)

    outs = {
        "fused": jax.block_until_ready(conv1x1_batchnorm(x, weight, gamma, beta)),
        "two_pass": jax.block_until_ready(
            conv1x1_batchnorm(x, weight, gamma, beta, force_two_pass=True)),
    }

    for name, out in outs.items():
        assert out.shape == (N, Cout, H, W)
        err_bf16 = float(jnp.max(jnp.abs(out - ref_bf16)))
        err_f32 = float(jnp.max(jnp.abs(out - ref_f32)))
        assert jnp.allclose(out, ref_bf16, atol=2e-2, rtol=2e-2), (
            f"{name}: max abs err vs bf16-operand ref = {err_bf16}")
        assert jnp.allclose(out, ref_f32, atol=6e-2, rtol=6e-2), (
            f"{name}: max abs err vs f32 ref = {err_f32}")

    print("KERNEL_OK")
</pallas_src>

<mosaic_0001>
module attributes {stable_mosaic.version = 11 : i64} {
  func.func @_fused_kernel(%arg0: i32, %arg1: memref<2x16x256xf32, #tpu.memory_space<vmem>>, %arg2: memref<96x16xf32, #tpu.memory_space<vmem>>, %arg3: memref<96x1xf32, #tpu.memory_space<vmem>>, %arg4: memref<96x1xf32, #tpu.memory_space<vmem>>, %arg5: memref<2x96x256xf32, #tpu.memory_space<vmem>>) attributes {dimension_semantics = [#tpu.dimension_semantics<arbitrary>], iteration_bounds = array<i64: 1>, scalar_prefetch = 0 : i64, scratch_operands = 0 : i64, tpu.core_type = #tpu.core_type<tc>, window_params = [{pipeline_mode = #tpu.pipeline_mode<synchronous>, transform_indices = @transform_0, window_bounds = array<i64: 2, 16, 256>}, {pipeline_mode = #tpu.pipeline_mode<synchronous>, transform_indices = @transform_1, window_bounds = array<i64: 96, 16>}, {pipeline_mode = #tpu.pipeline_mode<synchronous>, transform_indices = @transform_2, window_bounds = array<i64: 96, 1>}, {pipeline_mode = #tpu.pipeline_mode<synchronous>, transform_indices = @transform_3, window_bounds = array<i64: 96, 1>}, {pipeline_mode = #tpu.pipeline_mode<synchronous>, transform_indices = @transform_4, window_bounds = array<i64: 2, 96, 256>}]} {
    %c0 = arith.constant 0 : index
    %c0_0 = arith.constant 0 : index
    %0 = vector.load %arg2[%c0, %c0_0] : memref<96x16xf32, #tpu.memory_space<vmem>>, vector<96x16xf32>
    %cst = arith.constant 0.000000e+00 : f32
    %1 = vector.broadcast %cst : f32 to vector<16x1xf32>
    %cst_1 = arith.constant 0.000000e+00 : f32
    %2 = vector.broadcast %cst_1 : f32 to vector<16x16xf32>
    %c0_2 = arith.constant 0 : index
    %c0_3 = arith.constant 0 : index
    %c0_4 = arith.constant 0 : index
    %3 = vector.load %arg1[%c0_2, %c0_3, %c0_4] : memref<2x16x256xf32, #tpu.memory_space<vmem>>, vector<1x16x256xf32>
    %4 = vector.shape_cast %3 : vector<1x16x256xf32> to vector<16x256xf32>
    %5 = arith.truncf %4 : vector<16x256xf32> to vector<16x256xbf16>
    %cst_5 = arith.constant dense<0.000000e+00> : vector<16xf32>
    %6 = vector.multi_reduction <add>, %4, %cst_5 [1] : vector<16x256xf32> to vector<16xf32>
    %7 = vector.shape_cast %6 : vector<16xf32> to vector<16x1xf32>
    %8 = arith.addf %1, %7 : vector<16x1xf32>
    %cst_6 = arith.constant dense<0.000000e+00> : vector<16x16xf32>
    %9 = tpu.matmul %5, %5, %cst_6 {dimension_numbers = #tpu.dot_dimension_numbers<[1], [1], [0], [0], [0, 0, 1, 0], [], []>} : vector<16x256xbf16>, vector<16x256xbf16>, vector<16x16xf32> -> vector<16x16xf32>
    %10 = arith.addf %2, %9 : vector<16x16xf32>
    %c1 = arith.constant 1 : index
    %c0_7 = arith.constant 0 : index
    %c0_8 = arith.constant 0 : index
    %11 = vector.load %arg1[%c1, %c0_7, %c0_8] : memref<2x16x256xf32, #tpu.memory_space<vmem>>, vector<1x16x256xf32>
    %12 = vector.shape_cast %11 : vector<1x16x256xf32> to vector<16x256xf32>
    %13 = arith.truncf %12 : vector<16x256xf32> to vector<16x256xbf16>
    %cst_9 = arith.constant dense<0.000000e+00> : vector<16xf32>
    %14 = vector.multi_reduction <add>, %12, %cst_9 [1] : vector<16x256xf32> to vector<16xf32>
    %15 = vector.shape_cast %14 : vector<16xf32> to vector<16x1xf32>
    %16 = arith.addf %8, %15 : vector<16x1xf32>
    %cst_10 = arith.constant dense<0.000000e+00> : vector<16x16xf32>
    %17 = tpu.matmul %13, %13, %cst_10 {dimension_numbers = #tpu.dot_dimension_numbers<[1], [1], [0], [0], [0, 0, 1, 0], [], []>} : vector<16x256xbf16>, vector<16x256xbf16>, vector<16x16xf32> -> vector<16x16xf32>
    %18 = arith.addf %10, %17 : vector<16x16xf32>
    %cst_11 = arith.constant dense<0.000000e+00> : vector<96x1xf32>
    %19 = tpu.matmul %0, %16, %cst_11 {dimension_numbers = #tpu.dot_dimension_numbers<[1], [0], [0], [1], [0, 0, 1, 1], [], []>} : vector<96x16xf32>, vector<16x1xf32>, vector<96x1xf32> -> vector<96x1xf32>
    %cst_12 = arith.constant dense<0.000000e+00> : vector<96x16xf32>
    %20 = tpu.matmul %0, %18, %cst_12 {dimension_numbers = #tpu.dot_dimension_numbers<[1], [0], [0], [1], [0, 0, 1, 1], [], []>} : vector<96x16xf32>, vector<16x16xf32>, vector<96x16xf32> -> vector<96x16xf32>
    %21 = arith.mulf %20, %0 : vector<96x16xf32>
    %cst_13 = arith.constant dense<0.000000e+00> : vector<96xf32>
    %22 = vector.multi_reduction <add>, %21, %cst_13 [1] : vector<96x16xf32> to vector<96xf32>
    %23 = vector.shape_cast %22 : vector<96xf32> to vector<96x1xf32>
    %cst_14 = arith.constant 5.120000e+02 : f32
    %24 = vector.broadcast %cst_14 : f32 to vector<96x1xf32>
    %25 = arith.divf %19, %24 : vector<96x1xf32>
    %cst_15 = arith.constant 5.120000e+02 : f32
    %26 = vector.broadcast %cst_15 : f32 to vector<96x1xf32>
    %27 = arith.divf %23, %26 : vector<96x1xf32>
    %28 = arith.mulf %25, %25 : vector<96x1xf32>
    %29 = arith.subf %27, %28 : vector<96x1xf32>
    %cst_16 = arith.constant 0.000000e+00 : f32
    %30 = vector.broadcast %cst_16 : f32 to vector<96x1xf32>
    %31 = arith.maximumf %29, %30 : vector<96x1xf32>
    %cst_17 = arith.constant 9.99999974E-6 : f32
    %32 = vector.broadcast %cst_17 : f32 to vector<96x1xf32>
    %33 = arith.addf %31, %32 : vector<96x1xf32>
    %34 = math.rsqrt %33 : vector<96x1xf32>
    %c0_18 = arith.constant 0 : index
    %c0_19 = arith.constant 0 : index
    %35 = vector.load %arg3[%c0_18, %c0_19] : memref<96x1xf32, #tpu.memory_space<vmem>>, vector<96x1xf32>
    %36 = arith.mulf %35, %34 : vector<96x1xf32>
    %c0_20 = arith.constant 0 : index
    %c0_21 = arith.constant 0 : index
    %37 = vector.load %arg4[%c0_20, %c0_21] : memref<96x1xf32, #tpu.memory_space<vmem>>, vector<96x1xf32>
    %38 = arith.mulf %25, %36 : vector<96x1xf32>
    %39 = arith.subf %37, %38 : vector<96x1xf32>
    %40 = vector.broadcast %36 : vector<96x1xf32> to vector<96x16xf32>
    %41 = arith.mulf %0, %40 : vector<96x16xf32>
    %42 = arith.truncf %41 : vector<96x16xf32> to vector<96x16xbf16>
    %c0_22 = arith.constant 0 : index
    %c0_23 = arith.constant 0 : index
    %c0_24 = arith.constant 0 : index
    %43 = vector.load %arg1[%c0_22, %c0_23, %c0_24] : memref<2x16x256xf32, #tpu.memory_space<vmem>>, vector<1x16x256xf32>
    %44 = vector.shape_cast %43 : vector<1x16x256xf32> to vector<16x256xf32>
    %45 = arith.truncf %44 : vector<16x256xf32> to vector<16x256xbf16>
    %cst_25 = arith.constant dense<0.000000e+00> : vector<96x256xf32>
    %46 = tpu.matmul %42, %45, %cst_25 {dimension_numbers = #tpu.dot_dimension_numbers<[1], [0], [0], [1], [0, 0, 1, 1], [], []>} : vector<96x16xbf16>, vector<16x256xbf16>, vector<96x256xf32> -> vector<96x256xf32>
    %47 = vector.broadcast %39 : vector<96x1xf32> to vector<96x256xf32>
    %48 = arith.addf %46, %47 : vector<96x256xf32>
    %c0_26 = arith.constant 0 : index
    %c0_27 = arith.constant 0 : index
    %c0_28 = arith.constant 0 : index
    %49 = vector.load %arg5[%c0_26, %c0_27, %c0_28] : memref<2x96x256xf32, #tpu.memory_space<vmem>>, vector<1x96x256xf32>
    %50 = vector.shape_cast %49 : vector<1x96x256xf32> to vector<96x256xf32>
    %51 = vector.shape_cast %48 : vector<96x256xf32> to vector<1x96x256xf32>
    tpu.vector_store %arg5[%c0_26, %c0_27, %c0_28], %51 {strides = array<i32>} : memref<2x96x256xf32, #tpu.memory_space<vmem>>, vector<1x96x256xf32>,
    %c1_29 = arith.constant 1 : index
    %c0_30 = arith.constant 0 : index
    %c0_31 = arith.constant 0 : index
    %52 = vector.load %arg1[%c1_29, %c0_30, %c0_31] : memref<2x16x256xf32, #tpu.memory_space<vmem>>, vector<1x16x256xf32>
    %53 = vector.shape_cast %52 : vector<1x16x256xf32> to vector<16x256xf32>
    %54 = arith.truncf %53 : vector<16x256xf32> to vector<16x256xbf16>
    %cst_32 = arith.constant dense<0.000000e+00> : vector<96x256xf32>
    %55 = tpu.matmul %42, %54, %cst_32 {dimension_numbers = #tpu.dot_dimension_numbers<[1], [0], [0], [1], [0, 0, 1, 1], [], []>} : vector<96x16xbf16>, vector<16x256xbf16>, vector<96x256xf32> -> vector<96x256xf32>
    %56 = vector.broadcast %39 : vector<96x1xf32> to vector<96x256xf32>
    %57 = arith.addf %55, %56 : vector<96x256xf32>
    %c1_33 = arith.constant 1 : index
    %c0_34 = arith.constant 0 : index
    %c0_35 = arith.constant 0 : index
    %58 = vector.load %arg5[%c1_33, %c0_34, %c0_35] : memref<2x96x256xf32, #tpu.memory_space<vmem>>, vector<1x96x256xf32>
    %59 = vector.shape_cast %58 : vector<1x96x256xf32> to vector<96x256xf32>
    %60 = vector.shape_cast %57 : vector<96x256xf32> to vector<1x96x256xf32>
    tpu.vector_store %arg5[%c1_33, %c0_34, %c0_35], %60 {strides = array<i32>} : memref<2x96x256xf32, #tpu.memory_space<vmem>>, vector<1x96x256xf32>,
    return
  }
  func.func @transform_0(%arg0: i32) -> (i32, i32, i32) {
    %c0_i32 = arith.constant 0 : i32
    %c0_i32_0 = arith.constant 0 : i32
    %c0_i32_1 = arith.constant 0 : i32
    %c0_i32_2 = arith.constant 0 : i32
    return %c0_i32, %c0_i32_0, %c0_i32_1 : i32, i32, i32
  }
  func.func @transform_1(%arg0: i32) -> (i32, i32) {
    %c0_i32 = arith.constant 0 : i32
    %c0_i32_0 = arith.constant 0 : i32
    %c0_i32_1 = arith.constant 0 : i32
    return %c0_i32, %c0_i32_0 : i32, i32
  }
  func.func @transform_2(%arg0: i32) -> (i32, i32) {
    %c0_i32 = arith.constant 0 : i32
    %c0_i32_0 = arith.constant 0 : i32
    %c0_i32_1 = arith.constant 0 : i32
    return %c0_i32, %c0_i32_0 : i32, i32
  }
  func.func @transform_3(%arg0: i32) -> (i32, i32) {
    %c0_i32 = arith.constant 0 : i32
    %c0_i32_0 = arith.constant 0 : i32
    %c0_i32_1 = arith.constant 0 : i32
    return %c0_i32, %c0_i32_0 : i32, i32
  }
  func.func @transform_4(%arg0: i32) -> (i32, i32, i32) {
    %c0_i32 = arith.constant 0 : i32
    %c0_i32_0 = arith.constant 0 : i32
    %c0_i32_1 = arith.constant 0 : i32
    %c0_i32_2 = arith.constant 0 : i32
    return %c0_i32, %c0_i32_0, %c0_i32_1 : i32, i32, i32
  }
}

</mosaic_0001>

<llo_original>
// kernel: tpu_custom_call.1
$region0: #{tpu_custom_call.1}
  #allocation0 [shape = 'u32[]', space=smem, size = 0x4, offset = 0x4, fixed_abs, tag = 'smem constant byte address 0x4 - core index']
  #allocation1 [shape = 'u32[144,128]{1,0:T(1,128)}', space=vmem, size = 0x12000, scoped, tag = 'internal scratch']
  %s0 = inlined_call_operand.vmem [shape: f32[2,16,256], index: 0, kind: input, shape index: {}]
  %s1 = inlined_call_operand.vmem [shape: f32[96,16], index: 1, kind: input, shape index: {}]
  %s2 = inlined_call_operand.vmem [shape: f32[96,1], index: 2, kind: input, shape index: {}]
  %s3 = inlined_call_operand.vmem [shape: f32[96,1], index: 3, kind: input, shape index: {}]
  %s4 = inlined_call_operand.hbm [shape: f32[2,96,256], index: 4, kind: output, shape index: {}]
  %s5 = sld [smem:[#allocation0]]
  $region26: #{tpu_custom_call.1} parent=0
    _
  %s7 = ssub.s32 1, %s5
  %s8 = scalar_select 0, %s7, %s5
  $region1: #{tpu_custom_call.1} parent=0
    #allocation2 [shape = 'u8[196608]{0}', space=vmem, size = 0x30000, scoped, tag = 'output window, operand 0, single buffered']
    #allocation3 [shape = 's32[1]{0}', space=sflag, size = 0x4, scoped, tag = 'scoped memory for tpu_custom_call.1']
    %9 = vsyncpa [#allocation3], 0
    // Predicated region
    $region2: #{tpu_custom_call.1} parent=1 // pred_check
      _
    $region3: #{tpu_custom_call.1} parent=1 // pred_check_branch
      %11 = sbr.rel (0) target = $region5
    $region4: #{tpu_custom_call.1} parent=1 // pred_region
      _
    $region5: #{tpu_custom_call.1} parent=1 // pred_fallthru
      _
    // Predicated region
    $region6: #{tpu_custom_call.1} parent=1 // pred_check
      _
    $region7: #{tpu_custom_call.1} parent=1 // pred_check_branch
      %13 = sbr.rel (0) target = $region9
    $region8: #{tpu_custom_call.1} parent=1 // pred_region
      _
    $region9: #{tpu_custom_call.1} parent=1 // pred_fallthru
      _
    // Predicated region
    $region10: #{tpu_custom_call.1} parent=1 // pred_check
      _
    $region11: #{tpu_custom_call.1} parent=1 // pred_check_branch
      %15 = sbr.rel (0) target = $region13
    $region12: #{tpu_custom_call.1} parent=1 // pred_region
      _
    $region13: #{tpu_custom_call.1} parent=1 // pred_fallthru
      _
    // Predicated region
    $region14: #{tpu_custom_call.1} parent=1 // pred_check
      _
    $region15: #{tpu_custom_call.1} parent=1 // pred_check_branch
      %17 = sbr.rel (0) target = $region17
    $region16: #{tpu_custom_call.1} parent=1 // pred_region
      _
    $region17: #{tpu_custom_call.1} parent=1 // pred_fallthru
      _
    %v19 = vld [vmem:[%s1] sm:$0xff]
    %v20 = vld [vmem:[%s1 + $0x8] sm:$0xff]
    %v21 = vld [vmem:[%s1 + $0x10] sm:$0xff]
    %v22 = vld [vmem:[%s1 + $0x18] sm:$0xff]
    %v23 = vld [vmem:[%s1 + $0x20] sm:$0xff]
    %v24 = vld [vmem:[%s1 + $0x28] sm:$0xff]
    %v25 = vld [vmem:[%s1 + $0x30] sm:$0xff]
    %v26 = vld [vmem:[%s1 + $0x38] sm:$0xff]
    %v27 = vld [vmem:[%s1 + $0x40] sm:$0xff]
    %v28 = vld [vmem:[%s1 + $0x48] sm:$0xff]
    %v29 = vld [vmem:[%s1 + $0x50] sm:$0xff]
    %v30 = vld [vmem:[%s1 + $0x58] sm:$0xff]
    %v31 = vld [vmem:[%s0] sm:$0xff]
    %v32 = vld [vmem:[%s0 + $0x8] sm:$0xff]
    %v33 = vld [vmem:[%s0 + $0x10] sm:$0xff]
    %v34 = vld [vmem:[%s0 + $0x18] sm:$0xff]
    %v35 = vpack.c.bf16 %v33, %v31
    %v36 = vpack.c.bf16 %v34, %v32
    %v37 = vadd.f32 %v31, %v32
    %38 = vadd.xlane.f32.xlu0 %v37
    %v39 = vpop.xlane.xlu0 %38
    %v40 = vadd.f32 %v33, %v34
    %41 = vadd.xlane.f32.xlu0 %v40
    %v42 = vpop.xlane.xlu0 %41
    %v43 = vadd.f32 %v39, 0.0
    %v44 = vadd.f32 %v42, 0.0
    %s45 = scalar_lea.vmem %s0, 32
    %v46 = vld [vmem:[%s45] sm:$0xff]
    %v47 = vld [vmem:[%s45 + $0x8] sm:$0xff]
    %v48 = vld [vmem:[%s45 + $0x10] sm:$0xff]
    %v49 = vld [vmem:[%s45 + $0x18] sm:$0xff]
    %v50 = vpack.c.bf16 %v48, %v46
    %v51 = vpack.c.bf16 %v49, %v47
    %v52 = vadd.f32 %v46, %v47
    %53 = vadd.xlane.f32.xlu0 %v52
    %v54 = vpop.xlane.xlu0 %53
    %v55 = vadd.f32 %v48, %v49
    %56 = vadd.xlane.f32.xlu0 %v55
    %v57 = vpop.xlane.xlu0 %56
    %v58 = vadd.f32 %v43, %v54
    %v59 = vadd.f32 %v44, %v57
    %60 = vmatprep.subr.bf16.mxu0 0
    %61 = vmatpush1.bf16.xpose.msra.mxu0 0
    %62 = vmatprep.subr.bf16.mxu0 0
    %63 = vmatpush1.bf16.xpose.msra.mxu0 0
    %64 = vmatprep.subr.bf16.mxu0 0
    %65 = vmatpush1.bf16.xpose.msra.mxu0 0
    %66 = vmatprep.subr.bf16.mxu0 0
    %67 = vmatpush1.bf16.xpose.msra.mxu0 0
    %68 = vmatprep.subr.bf16.mxu0 0
    %69 = vmatpush1.bf16.xpose.msra.mxu0 0
    %70 = vmatprep.subr.bf16.mxu0 0
    %71 = vmatpush1.bf16.xpose.msra.mxu0 0
    %72 = vmatprep.subr.bf16.mxu0 0
    %73 = vmatpush1.bf16.xpose.msra.mxu0 0
    %74 = vmatprep.subr.bf16.mxu0 %v51
    %75 = vmatpush1.bf16.xpose.msra.mxu0 %v50
    %76 = vmatprep.subr.bf16.mxu0 0
    %77 = vmatpush2.bf16.xpose.msra.mxu0 0
    %78 = vmatprep.subr.bf16.mxu0 0
    %79 = vmatpush2.bf16.xpose.msra.mxu0 0
    %80 = vmatprep.subr.bf16.mxu0 0
    %81 = vmatpush2.bf16.xpose.msra.mxu0 0
    %82 = vmatprep.subr.bf16.mxu0 0
    %83 = vmatpush2.bf16.xpose.msra.mxu0 0
    %84 = vmatprep.subr.bf16.mxu0 0
    %85 = vmatpush2.bf16.xpose.msra.mxu0 0
    %86 = vmatprep.subr.bf16.mxu0 0
    %87 = vmatpush2.bf16.xpose.msra.mxu0 0
    %88 = vmatprep.subr.bf16.mxu0 0
    %89 = vmatpush2.bf16.xpose.msra.mxu0 0
    %90 = vmatprep.subr.bf16.mxu0 0
    %91 = vmatpush2.bf16.xpose.msra.mxu0 0
    %92 = vmatprep.mubr.bf16.mxu0 %v51
    %93 = vmatmul.mubr.bf16.gmra.mxu0 %v50
    %v94 = vpop.f32.mrf.mxu0
    %v95 = vadd.f32 0.0, %v94
    %v96 = vpop.f32.mrf.mxu0
    %v97 = vpop.f32.mrf.mxu0
    %v98 = vadd.f32 0.0, %v97
    %v99 = vpop.f32.mrf.mxu0
    %100 = vdwg.mxu0
    %101 = vmatprep.subr.bf16.mxu0 0
    %102 = vmatpush1.bf16.xpose.msra.mxu0 0
    %103 = vmatprep.subr.bf16.mxu0 0
    %104 = vmatpush1.bf16.xpose.msra.mxu0 0
    %105 = vmatprep.subr.bf16.mxu0 0
    %106 = vmatpush1.bf16.xpose.msra.mxu0 0
    %107 = vmatprep.subr.bf16.mxu0 0
    %108 = vmatpush1.bf16.xpose.msra.mxu0 0
    %109 = vmatprep.subr.bf16.mxu0 0
    %110 = vmatpush1.bf16.xpose.msra.mxu0 0
    %111 = vmatprep.subr.bf16.mxu0 0
    %112 = vmatpush1.bf16.xpose.msra.mxu0 0
    %113 = vmatprep.subr.bf16.mxu0 0
    %114 = vmatpush1.bf16.xpose.msra.mxu0 0
    %115 = vmatprep.subr.bf16.mxu0 %v36
    %116 = vmatpush1.bf16.xpose.msra.mxu0 %v35
    %117 = vmatprep.subr.bf16.mxu0 0
    %118 = vmatpush2.bf16.xpose.msra.mxu0 0
    %119 = vmatprep.subr.bf16.mxu0 0
    %120 = vmatpush2.bf16.xpose.msra.mxu0 0
    %121 = vmatprep.subr.bf16.mxu0 0
    %122 = vmatpush2.bf16.xpose.msra.mxu0 0
    %123 = vmatprep.subr.bf16.mxu0 0
    %124 = vmatpush2.bf16.xpose.msra.mxu0 0
    %125 = vmatprep.subr.bf16.mxu0 0
    %126 = vmatpush2.bf16.xpose.msra.mxu0 0
    %127 = vmatprep.subr.bf16.mxu0 0
    %128 = vmatpush2.bf16.xpose.msra.mxu0 0
    %129 = vmatprep.subr.bf16.mxu0 0
    %130 = vmatpush2.bf16.xpose.msra.mxu0 0
    %131 = vmatprep.subr.bf16.mxu0 0
    %132 = vmatpush2.bf16.xpose.msra.mxu0 0
    %133 = vmatprep.mubr.bf16.mxu0 %v36
    %134 = vmatmul.mubr.bf16.gmra.mxu0 %v35
    %v135 = vpop.f32.mrf.mxu0
    %v136 = vadd.f32 %v95, %v135
    %v137 = vpop.f32.mrf.mxu0
    %v138 = vpop.f32.mrf.mxu0
    %v139 = vadd.f32 %v98, %v138
    %v140 = vpop.f32.mrf.mxu0
    %141 = vdwg.mxu0
    %vm142 = vcmask 130048
    %v144 = vsel %vm142, %v19, 0
    %v147 = vsel %vm142, %v20, 0
    %v150 = vsel %vm142, %v21, 0
    %v153 = vsel %vm142, %v22, 0
    %v156 = vsel %vm142, %v23, 0
    %v159 = vsel %vm142, %v24, 0
    %v162 = vsel %vm142, %v25, 0
    %v165 = vsel %vm142, %v26, 0
    %v168 = vsel %vm142, %v27, 0
    %v171 = vsel %vm142, %v28, 0
    %v174 = vsel %vm142, %v29, 0
    %v177 = vsel %vm142, %v30, 0
    %179 = vmatprep.subr.mxu0 0.0
    %180 = vmatpush1.msra.mxu0 0.0
    %181 = vmatprep.subr.mxu0 0.0
    %182 = vmatpush1.msra.mxu0 0.0
    %183 = vmatprep.subr.mxu0 0.0
    %184 = vmatpush1.msra.mxu0 0.0
    %185 = vmatprep.subr.mxu0 0.0
    %186 = vmatpush1.msra.mxu0 0.0
    %187 = vmatprep.subr.mxu0 0.0
    %188 = vmatpush1.msra.mxu0 0.0
    %189 = vmatprep.subr.mxu0 0.0
    %190 = vmatpush1.msra.mxu0 0.0
    %191 = vmatprep.subr.mxu0 0.0
    %192 = vmatpush1.msra.mxu0 0.0
    %193 = vmatprep.subr.mxu0 0.0
    %194 = vmatpush1.msra.mxu0 0.0
    %195 = vmatprep.subr.mxu0 0.0
    %196 = vmatpush1.msra.mxu0 0.0
    %197 = vmatprep.subr.mxu0 0.0
    %198 = vmatpush1.msra.mxu0 0.0
    %199 = vmatprep.subr.mxu0 0.0
    %200 = vmatpush1.msra.mxu0 0.0
    %201 = vmatprep.subr.mxu0 0.0
    %202 = vmatpush1.msra.mxu0 0.0
    %203 = vmatprep.subr.mxu0 0.0
    %204 = vmatpush1.msra.mxu0 0.0
    %205 = vmatprep.subr.mxu0 0.0
    %206 = vmatpush1.msra.mxu0 0.0
    %207 = vmatprep.subr.mxu0 0.0
    %208 = vmatpush1.msra.mxu0 %v59
    %209 = vmatprep.subr.mxu0 0.0
    %210 = vmatpush1.msra.mxu0 %v58
    %211 = vmatprep.subr.mxu0 0.0
    %212 = vmatpush2.msra.mxu0 0.0
    %213 = vmatprep.subr.mxu0 0.0
    %214 = vmatpush2.msra.mxu0 0.0
    %215 = vmatprep.subr.mxu0 0.0
    %216 = vmatpush2.msra.mxu0 0.0
    %217 = vmatprep.subr.mxu0 0.0
    %218 = vmatpush2.msra.mxu0 0.0
    %219 = vmatprep.subr.mxu0 0.0
    %220 = vmatpush2.msra.mxu0 0.0
    %221 = vmatprep.subr.mxu0 0.0
    %222 = vmatpush2.msra.mxu0 0.0
    %223 = vmatprep.subr.mxu0 0.0
    %224 = vmatpush2.msra.mxu0 0.0
    %225 = vmatprep.subr.mxu0 0.0
    %226 = vmatpush2.msra.mxu0 0.0
    %227 = vmatprep.subr.mxu0 0.0
    %228 = vmatpush2.msra.mxu0 0.0
    %229 = vmatprep.subr.mxu0 0.0
    %230 = vmatpush2.msra.mxu0 0.0
    %231 = vmatprep.subr.mxu0 0.0
    %232 = vmatpush2.msra.mxu0 0.0
    %233 = vmatprep.subr.mxu0 0.0
    %234 = vmatpush2.msra.mxu0 0.0
    %235 = vmatprep.subr.mxu0 0.0
    %236 = vmatpush2.msra.mxu0 0.0
    %237 = vmatprep.subr.mxu0 0.0
    %238 = vmatpush2.msra.mxu0 0.0
    %239 = vmatprep.subr.mxu0 0.0
    %240 = vmatpush2.msra.mxu0 0.0
    %241 = vmatprep.subr.mxu0 0.0
    %242 = vmatpush2.msra.mxu0 0.0
    %243 = vmatprep.mubr.f32.mxu0 0.0
    %244 = vmatmul.mubr.f32.gmra.mxu0 %v144
    %v245 = vpop.f32.mrf.mxu0
    %v246 = vadd.f32 0.0, %v245
    %v247 = vpop.f32.mrf.mxu0
    %248 = vmatprep.mubr.f32.mxu0 0.0
    %249 = vmatmul.mubr.f32.gmra.mxu0 %v147
    %v250 = vpop.f32.mrf.mxu0
    %v251 = vadd.f32 0.0, %v250
    %v252 = vpop.f32.mrf.mxu0
    %253 = vmatprep.mubr.f32.mxu0 0.0
    %254 = vmatmul.mubr.f32.gmra.mxu0 %v150
    %v255 = vpop.f32.mrf.mxu0
    %v256 = vadd.f32 0.0, %v255
    %v257 = vpop.f32.mrf.mxu0
    %258 = vmatprep.mubr.f32.mxu0 0.0
    %259 = vmatmul.mubr.f32.gmra.mxu0 %v153
    %v260 = vpop.f32.mrf.mxu0
    %v261 = vadd.f32 0.0, %v260
    %v262 = vpop.f32.mrf.mxu0
    %263 = vmatprep.mubr.f32.mxu0 0.0
    %264 = vmatmul.mubr.f32.gmra.mxu0 %v156
    %v265 = vpop.f32.mrf.mxu0
    %v266 = vadd.f32 0.0, %v265
    %v267 = vpop.f32.mrf.mxu0
    %268 = vmatprep.mubr.f32.mxu0 0.0
    %269 = vmatmul.mubr.f32.gmra.mxu0 %v159
    %v270 = vpop.f32.mrf.mxu0
    %v271 = vadd.f32 0.0, %v270
    %v272 = vpop.f32.mrf.mxu0
    %273 = vmatprep.mubr.f32.mxu0 0.0
    %274 = vmatmul.mubr.f32.gmra.mxu0 %v162
    %v275 = vpop.f32.mrf.mxu0
    %v276 = vadd.f32 0.0, %v275
    %v277 = vpop.f32.mrf.mxu0
    %278 = vmatprep.mubr.f32.mxu0 0.0
    %279 = vmatmul.mubr.f32.gmra.mxu0 %v165
    %v280 = vpop.f32.mrf.mxu0
    %v281 = vadd.f32 0.0, %v280
    %v282 = vpop.f32.mrf.mxu0
    %283 = vmatprep.mubr.f32.mxu0 0.0
    %284 = vmatmul.mubr.f32.gmra.mxu0 %v168
    %v285 = vpop.f32.mrf.mxu0
    %v286 = vadd.f32 0.0, %v285
    %v287 = vpop.f32.mrf.mxu0
    %288 = vmatprep.mubr.f32.mxu0 0.0
    %289 = vmatmul.mubr.f32.gmra.mxu0 %v171
    %v290 = vpop.f32.mrf.mxu0
    %v291 = vadd.f32 0.0, %v290
    %v292 = vpop.f32.mrf.mxu0
    %293 = vmatprep.mubr.f32.mxu0 0.0
    %294 = vmatmul.mubr.f32.gmra.mxu0 %v174
    %v295 = vpop.f32.mrf.mxu0
    %v296 = vadd.f32 0.0, %v295
    %v297 = vpop.f32.mrf.mxu0
    %298 = vmatprep.mubr.f32.mxu0 0.0
    %299 = vmatmul.mubr.f32.gmra.mxu0 %v177
    %v300 = vpop.f32.mrf.mxu0
    %v301 = vadd.f32 0.0, %v300
    %v302 = vpop.f32.mrf.mxu0
    %303 = vdwg.mxu0
    %304 = vmatprep.subr.mxu0 0.0
    %305 = vmatpush1.msra.mxu0 0.0
    %306 = vmatprep.subr.mxu0 0.0
    %307 = vmatpush1.msra.mxu0 0.0
    %308 = vmatprep.subr.mxu0 0.0
    %309 = vmatpush1.msra.mxu0 0.0
    %310 = vmatprep.subr.mxu0 0.0
    %311 = vmatpush1.msra.mxu0 0.0
    %312 = vmatprep.subr.mxu0 0.0
    %313 = vmatpush1.msra.mxu0 0.0
    %314 = vmatprep.subr.mxu0 0.0
    %315 = vmatpush1.msra.mxu0 0.0
    %316 = vmatprep.subr.mxu0 0.0
    %317 = vmatpush1.msra.mxu0 0.0
    %318 = vmatprep.subr.mxu0 0.0
    %319 = vmatpush1.msra.mxu0 0.0
    %320 = vmatprep.subr.mxu0 0.0
    %321 = vmatpush1.msra.mxu0 0.0
    %322 = vmatprep.subr.mxu0 0.0
    %323 = vmatpush1.msra.mxu0 0.0
    %324 = vmatprep.subr.mxu0 0.0
    %325 = vmatpush1.msra.mxu0 0.0
    %326 = vmatprep.subr.mxu0 0.0
    %327 = vmatpush1.msra.mxu0 0.0
    %328 = vmatprep.subr.mxu0 0.0
    %329 = vmatpush1.msra.mxu0 0.0
    %330 = vmatprep.subr.mxu0 0.0
    %331 = vmatpush1.msra.mxu0 0.0
    %332 = vmatprep.subr.mxu0 0.0
    %333 = vmatpush1.msra.mxu0 %v139
    %334 = vmatprep.subr.mxu0 0.0
    %335 = vmatpush1.msra.mxu0 %v136
    %336 = vmatprep.subr.mxu0 0.0
    %337 = vmatpush2.msra.mxu0 0.0
    %338 = vmatprep.subr.mxu0 0.0
    %339 = vmatpush2.msra.mxu0 0.0
    %340 = vmatprep.subr.mxu0 0.0
    %341 = vmatpush2.msra.mxu0 0.0
    %342 = vmatprep.subr.mxu0 0.0
    %343 = vmatpush2.msra.mxu0 0.0
    %344 = vmatprep.subr.mxu0 0.0
    %345 = vmatpush2.msra.mxu0 0.0
    %346 = vmatprep.subr.mxu0 0.0
    %347 = vmatpush2.msra.mxu0 0.0
    %348 = vmatprep.subr.mxu0 0.0
    %349 = vmatpush2.msra.mxu0 0.0
    %350 = vmatprep.subr.mxu0 0.0
    %351 = vmatpush2.msra.mxu0 0.0
    %352 = vmatprep.subr.mxu0 0.0
    %353 = vmatpush2.msra.mxu0 0.0
    %354 = vmatprep.subr.mxu0 0.0
    %355 = vmatpush2.msra.mxu0 0.0
    %356 = vmatprep.subr.mxu0 0.0
    %357 = vmatpush2.msra.mxu0 0.0
    %358 = vmatprep.subr.mxu0 0.0
    %359 = vmatpush2.msra.mxu0 0.0
    %360 = vmatprep.subr.mxu0 0.0
    %361 = vmatpush2.msra.mxu0 0.0
    %362 = vmatprep.subr.mxu0 0.0
    %363 = vmatpush2.msra.mxu0 0.0
    %364 = vmatprep.subr.mxu0 0.0
    %365 = vmatpush2.msra.mxu0 0.0
    %366 = vmatprep.subr.mxu0 0.0
    %367 = vmatpush2.msra.mxu0 0.0
    %368 = vmatprep.mubr.f32.mxu0 0.0
    %369 = vmatmul.mubr.f32.gmra.mxu0 %v144
    %v370 = vpop.f32.mrf.mxu0
    %v371 = vadd.f32 0.0, %v370
    %v372 = vpop.f32.mrf.mxu0
    %373 = vmatprep.mubr.f32.mxu0 0.0
    %374 = vmatmul.mubr.f32.gmra.mxu0 %v147
    %v375 = vpop.f32.mrf.mxu0
    %v376 = vadd.f32 0.0, %v375
    %v377 = vpop.f32.mrf.mxu0
    %378 = vmatprep.mubr.f32.mxu0 0.0
    %379 = vmatmul.mubr.f32.gmra.mxu0 %v150
    %v380 = vpop.f32.mrf.mxu0
    %v381 = vadd.f32 0.0, %v380
    %v382 = vpop.f32.mrf.mxu0
    %383 = vmatprep.mubr.f32.mxu0 0.0
    %384 = vmatmul.mubr.f32.gmra.mxu0 %v153
    %v385 = vpop.f32.mrf.mxu0
    %v386 = vadd.f32 0.0, %v385
    %v387 = vpop.f32.mrf.mxu0
    %388 = vmatprep.mubr.f32.mxu0 0.0
    %389 = vmatmul.mubr.f32.gmra.mxu0 %v156
    %v390 = vpop.f32.mrf.mxu0
    %v391 = vadd.f32 0.0, %v390
    %v392 = vpop.f32.mrf.mxu0
    %393 = vmatprep.mubr.f32.mxu0 0.0
    %394 = vmatmul.mubr.f32.gmra.mxu0 %v159
    %v395 = vpop.f32.mrf.mxu0
    %v396 = vadd.f32 0.0, %v395
    %v397 = vpop.f32.mrf.mxu0
    %398 = vmatprep.mubr.f32.mxu0 0.0
    %399 = vmatmul.mubr.f32.gmra.mxu0 %v162
    %v400 = vpop.f32.mrf.mxu0
    %v401 = vadd.f32 0.0, %v400
    %v402 = vpop.f32.mrf.mxu0
    %403 = vmatprep.mubr.f32.mxu0 0.0
    %404 = vmatmul.mubr.f32.gmra.mxu0 %v165
    %v405 = vpop.f32.mrf.mxu0
    %v406 = vadd.f32 0.0, %v405
    %v407 = vpop.f32.mrf.mxu0
    %408 = vmatprep.mubr.f32.mxu0 0.0
    %409 = vmatmul.mubr.f32.gmra.mxu0 %v168
    %v410 = vpop.f32.mrf.mxu0
    %v411 = vadd.f32 0.0, %v410
    %v412 = vpop.f32.mrf.mxu0
    %413 = vmatprep.mubr.f32.mxu0 0.0
    %414 = vmatmul.mubr.f32.gmra.mxu0 %v171
    %v415 = vpop.f32.mrf.mxu0
    %v416 = vadd.f32 0.0, %v415
    %v417 = vpop.f32.mrf.mxu0
    %418 = vmatprep.mubr.f32.mxu0 0.0
    %419 = vmatmul.mubr.f32.gmra.mxu0 %v174
    %v420 = vpop.f32.mrf.mxu0
    %v421 = vadd.f32 0.0, %v420
    %v422 = vpop.f32.mrf.mxu0
    %423 = vmatprep.mubr.f32.mxu0 0.0
    %424 = vmatmul.mubr.f32.gmra.mxu0 %v177
    %v425 = vpop.f32.mrf.mxu0
    %v426 = vadd.f32 0.0, %v425
    %v427 = vpop.f32.mrf.mxu0
    %428 = vdwg.mxu0
    %v429 = vmul.f32 %v371, %v19
    %v430 = vmul.f32 %v376, %v20
    %v431 = vmul.f32 %v381, %v21
    %v432 = vmul.f32 %v386, %v22
    %v433 = vmul.f32 %v391, %v23
    %v434 = vmul.f32 %v396, %v24
    %v435 = vmul.f32 %v401, %v25
    %v436 = vmul.f32 %v406, %v26
    %v437 = vmul.f32 %v411, %v27
    %v438 = vmul.f32 %v416, %v28
    %v439 = vmul.f32 %v421, %v29
    %v440 = vmul.f32 %v426, %v30
    %v441 = vsel %vm142, %v429, 0.0
    %442 = vadd.xlane.f32.xlu0 %v441
    %v443 = vpop.xlane.xlu0 %442
    %v444 = vsel %vm142, %v430, 0.0
    %445 = vadd.xlane.f32.xlu0 %v444
    %v446 = vpop.xlane.xlu0 %445
    %v447 = vsel %vm142, %v431, 0.0
    %448 = vadd.xlane.f32.xlu0 %v447
    %v449 = vpop.xlane.xlu0 %448
    %v450 = vsel %vm142, %v432, 0.0
    %451 = vadd.xlane.f32.xlu0 %v450
    %v452 = vpop.xlane.xlu0 %451
    %v453 = vsel %vm142, %v433, 0.0
    %454 = vadd.xlane.f32.xlu0 %v453
    %v455 = vpop.xlane.xlu0 %454
    %v456 = vsel %vm142, %v434, 0.0
    %457 = vadd.xlane.f32.xlu0 %v456
    %v458 = vpop.xlane.xlu0 %457
    %v459 = vsel %vm142, %v435, 0.0
    %460 = vadd.xlane.f32.xlu0 %v459
    %v461 = vpop.xlane.xlu0 %460
    %v462 = vsel %vm142, %v436, 0.0
    %463 = vadd.xlane.f32.xlu0 %v462
    %v464 = vpop.xlane.xlu0 %463
    %v465 = vsel %vm142, %v437, 0.0
    %466 = vadd.xlane.f32.xlu0 %v465
    %v467 = vpop.xlane.xlu0 %466
    %v468 = vsel %vm142, %v438, 0.0
    %469 = vadd.xlane.f32.xlu0 %v468
    %v470 = vpop.xlane.xlu0 %469
    %v471 = vsel %vm142, %v439, 0.0
    %472 = vadd.xlane.f32.xlu0 %v471
    %v473 = vpop.xlane.xlu0 %472
    %v474 = vsel %vm142, %v440, 0.0
    %475 = vadd.xlane.f32.xlu0 %v474
    %v476 = vpop.xlane.xlu0 %475
    %v477 = vrcp.pop 512.0
    %v478 = vmul.f32 %v246, %v477
    %v479 = vmul.f32 %v251, %v477
    %v480 = vmul.f32 %v256, %v477
    %v481 = vmul.f32 %v261, %v477
    %v482 = vmul.f32 %v266, %v477
    %v483 = vmul.f32 %v271, %v477
    %v484 = vmul.f32 %v276, %v477
    %v485 = vmul.f32 %v281, %v477
    %v486 = vmul.f32 %v286, %v477
    %v487 = vmul.f32 %v291, %v477
    %v488 = vmul.f32 %v296, %v477
    %v489 = vmul.f32 %v301, %v477
    %v490 = vmul.f32 %v443, %v477
    %v491 = vmul.f32 %v446, %v477
    %v492 = vmul.f32 %v449, %v477
    %v493 = vmul.f32 %v452, %v477
    %v494 = vmul.f32 %v455, %v477
    %v495 = vmul.f32 %v458, %v477
    %v496 = vmul.f32 %v461, %v477
    %v497 = vmul.f32 %v464, %v477
    %v498 = vmul.f32 %v467, %v477
    %v499 = vmul.f32 %v470, %v477
    %v500 = vmul.f32 %v473, %v477
    %v501 = vmul.f32 %v476, %v477
    %v502 = vmul.f32 %v478, %v478
    %v503 = vmul.f32 %v479, %v479
    %v504 = vmul.f32 %v480, %v480
    %v505 = vmul.f32 %v481, %v481
    %v506 = vmul.f32 %v482, %v482
    %v507 = vmul.f32 %v483, %v483
    %v508 = vmul.f32 %v484, %v484
    %v509 = vmul.f32 %v485, %v485
    %v510 = vmul.f32 %v486, %v486
    %v511 = vmul.f32 %v487, %v487
    %v512 = vmul.f32 %v488, %v488
    %v513 = vmul.f32 %v489, %v489
    %v514 = vsub.f32 %v490, %v502
    %v515 = vsub.f32 %v491, %v503
    %v516 = vsub.f32 %v492, %v504
    %v517 = vsub.f32 %v493, %v505
    %v518 = vsub.f32 %v494, %v506
    %v519 = vsub.f32 %v495, %v507
    %v520 = vsub.f32 %v496, %v508
    %v521 = vsub.f32 %v497, %v509
    %v522 = vsub.f32 %v498, %v510
    %v523 = vsub.f32 %v499, %v511
    %v524 = vsub.f32 %v500, %v512
    %v525 = vsub.f32 %v501, %v513
    %v526 = vmax.f32 %v514, 0.0
    %v527 = vmax.f32 %v515, 0.0
    %v528 = vmax.f32 %v516, 0.0
    %v529 = vmax.f32 %v517, 0.0
    %v530 = vmax.f32 %v518, 0.0
    %v531 = vmax.f32 %v519, 0.0
    %v532 = vmax.f32 %v520, 0.0
    %v533 = vmax.f32 %v521, 0.0
    %v534 = vmax.f32 %v522, 0.0
    %v535 = vmax.f32 %v523, 0.0
    %v536 = vmax.f32 %v524, 0.0
    %v537 = vmax.f32 %v525, 0.0
    %v538 = vadd.f32 %v526, 1e-05
    %v539 = vadd.f32 %v527, 1e-05
    %v540 = vadd.f32 %v528, 1e-05
    %v541 = vadd.f32 %v529, 1e-05
    %v542 = vadd.f32 %v530, 1e-05
    %v543 = vadd.f32 %v531, 1e-05
    %v544 = vadd.f32 %v532, 1e-05
    %v545 = vadd.f32 %v533, 1e-05
    %v546 = vadd.f32 %v534, 1e-05
    %v547 = vadd.f32 %v535, 1e-05
    %v548 = vadd.f32 %v536, 1e-05
    %v549 = vadd.f32 %v537, 1e-05
    %v550 = vrsqrt.pop %v538
    %v551 = vrsqrt.pop %v539
    %v552 = vrsqrt.pop %v540
    %v553 = vrsqrt.pop %v541
    %v554 = vrsqrt.pop %v542
    %v555 = vrsqrt.pop %v543
    %v556 = vrsqrt.pop %v544
    %v557 = vrsqrt.pop %v545
    %v558 = vrsqrt.pop %v546
    %v559 = vrsqrt.pop %v547
    %v560 = vrsqrt.pop %v548
    %v561 = vrsqrt.pop %v549
    %v562 = vld [vmem:[%s2] sm:$0xff]
    %v563 = vld [vmem:[%s2 + $0x8] sm:$0xff]
    %v564 = vld [vmem:[%s2 + $0x10] sm:$0xff]
    %v565 = vld [vmem:[%s2 + $0x18] sm:$0xff]
    %v566 = vld [vmem:[%s2 + $0x20] sm:$0xff]
    %v567 = vld [vmem:[%s2 + $0x28] sm:$0xff]
    %v568 = vld [vmem:[%s2 + $0x30] sm:$0xff]
    %v569 = vld [vmem:[%s2 + $0x38] sm:$0xff]
    %v570 = vld [vmem:[%s2 + $0x40] sm:$0xff]
    %v571 = vld [vmem:[%s2 + $0x48] sm:$0xff]
    %v572 = vld [vmem:[%s2 + $0x50] sm:$0xff]
    %v573 = vld [vmem:[%s2 + $0x58] sm:$0xff]
    %v574 = vmul.f32 %v562, %v550
    %v575 = vmul.f32 %v563, %v551
    %v576 = vmul.f32 %v564, %v552
    %v577 = vmul.f32 %v565, %v553
    %v578 = vmul.f32 %v566, %v554
    %v579 = vmul.f32 %v567, %v555
    %v580 = vmul.f32 %v568, %v556
    %v581 = vmul.f32 %v569, %v557
    %v582 = vmul.f32 %v570, %v558
    %v583 = vmul.f32 %v571, %v559
    %v584 = vmul.f32 %v572, %v560
    %v585 = vmul.f32 %v573, %v561
    %v586 = vld [vmem:[%s3] sm:$0xff]
    %v587 = vld [vmem:[%s3 + $0x8] sm:$0xff]
    %v588 = vld [vmem:[%s3 + $0x10] sm:$0xff]
    %v589 = vld [vmem:[%s3 + $0x18] sm:$0xff]
    %v590 = vld [vmem:[%s3 + $0x20] sm:$0xff]
    %v591 = vld [vmem:[%s3 + $0x28] sm:$0xff]
    %v592 = vld [vmem:[%s3 + $0x30] sm:$0xff]
    %v593 = vld [vmem:[%s3 + $0x38] sm:$0xff]
    %v594 = vld [vmem:[%s3 + $0x40] sm:$0xff]
    %v595 = vld [vmem:[%s3 + $0x48] sm:$0xff]
    %v596 = vld [vmem:[%s3 + $0x50] sm:$0xff]
    %v597 = vld [vmem:[%s3 + $0x58] sm:$0xff]
    %v598 = vmul.f32 %v478, %v574
    %v599 = vmul.f32 %v479, %v575
    %v600 = vmul.f32 %v480, %v576
    %v601 = vmul.f32 %v481, %v577
    %v602 = vmul.f32 %v482, %v578
    %v603 = vmul.f32 %v483, %v579
    %v604 = vmul.f32 %v484, %v580
    %v605 = vmul.f32 %v485, %v581
    %v606 = vmul.f32 %v486, %v582
    %v607 = vmul.f32 %v487, %v583
    %v608 = vmul.f32 %v488, %v584
    %v609 = vmul.f32 %v489, %v585
    %v610 = vsub.f32 %v586, %v598
    %v611 = vsub.f32 %v587, %v599
    %v612 = vsub.f32 %v588, %v600
    %v613 = vsub.f32 %v589, %v601
    %v614 = vsub.f32 %v590, %v602
    %v615 = vsub.f32 %v591, %v603
    %v616 = vsub.f32 %v592, %v604
    %v617 = vsub.f32 %v593, %v605
    %v618 = vsub.f32 %v594, %v606
    %v619 = vsub.f32 %v595, %v607
    %v620 = vsub.f32 %v596, %v608
    %v621 = vsub.f32 %v597, %v609
    %623 = vset.pattern.permute.xlu0 0
    %624 = vperm.xlu0 %623, %v574
    %v625 = vpop.permute.xlu0 %624
    %628 = vset.pattern.permute.xlu0 0
    %629 = vperm.xlu0 %628, %v575
    %v630 = vpop.permute.xlu0 %629
    %633 = vset.pattern.permute.xlu0 0
    %634 = vperm.xlu0 %633, %v576
    %v635 = vpop.permute.xlu0 %634
    %638 = vset.pattern.permute.xlu0 0
    %639 = vperm.xlu0 %638, %v577
    %v640 = vpop.permute.xlu0 %639
    %643 = vset.pattern.permute.xlu0 0
    %644 = vperm.xlu0 %643, %v578
    %v645 = vpop.permute.xlu0 %644
    %648 = vset.pattern.permute.xlu0 0
    %649 = vperm.xlu0 %648, %v579
    %v650 = vpop.permute.xlu0 %649
    %653 = vset.pattern.permute.xlu0 0
    %654 = vperm.xlu0 %653, %v580
    %v655 = vpop.permute.xlu0 %654
    %658 = vset.pattern.permute.xlu0 0
    %659 = vperm.xlu0 %658, %v581
    %v660 = vpop.permute.xlu0 %659
    %663 = vset.pattern.permute.xlu0 0
    %664 = vperm.xlu0 %663, %v582
    %v665 = vpop.permute.xlu0 %664
    %668 = vset.pattern.permute.xlu0 0
    %669 = vperm.xlu0 %668, %v583
    %v670 = vpop.permute.xlu0 %669
    %673 = vset.pattern.permute.xlu0 0
    %674 = vperm.xlu0 %673, %v584
    %v675 = vpop.permute.xlu0 %674
    %678 = vset.pattern.permute.xlu0 0
    %679 = vperm.xlu0 %678, %v585
    %v680 = vpop.permute.xlu0 %679
    %v682 = vmul.f32 %v19, %v625
    %v683 = vmul.f32 %v20, %v630
    %v684 = vmul.f32 %v21, %v635
    %v685 = vmul.f32 %v22, %v640
    %v686 = vmul.f32 %v23, %v645
    %v687 = vmul.f32 %v24, %v650
    %v688 = vmul.f32 %v25, %v655
    %v689 = vmul.f32 %v26, %v660
    %v690 = vmul.f32 %v27, %v665
    %v691 = vmul.f32 %v28, %v670
    %v692 = vmul.f32 %v29, %v675
    %v693 = vmul.f32 %v30, %v680
    %v694 = vpack.c.bf16 %v683, %v682
    %v695 = vpack.c.bf16 %v685, %v684
    %v696 = vpack.c.bf16 %v687, %v686
    %v697 = vpack.c.bf16 %v689, %v688
    %v698 = vpack.c.bf16 %v691, %v690
    %v699 = vpack.c.bf16 %v693, %v692
    %701 = vset.pattern.permute.xlu0 0
    %702 = vperm.xlu0 %701, %v610
    %v703 = vpop.permute.xlu0 %702
    %706 = vset.pattern.permute.xlu0 0
    %707 = vperm.xlu0 %706, %v611
    %v708 = vpop.permute.xlu0 %707
    %711 = vset.pattern.permute.xlu0 0
    %712 = vperm.xlu0 %711, %v612
    %v713 = vpop.permute.xlu0 %712
    %716 = vset.pattern.permute.xlu0 0
    %717 = vperm.xlu0 %716, %v613
    %v718 = vpop.permute.xlu0 %717
    %721 = vset.pattern.permute.xlu0 0
    %722 = vperm.xlu0 %721, %v614
    %v723 = vpop.permute.xlu0 %722
    %726 = vset.pattern.permute.xlu0 0
    %727 = vperm.xlu0 %726, %v615
    %v728 = vpop.permute.xlu0 %727
    %731 = vset.pattern.permute.xlu0 0
    %732 = vperm.xlu0 %731, %v616
    %v733 = vpop.permute.xlu0 %732
    %736 = vset.pattern.permute.xlu0 0
    %737 = vperm.xlu0 %736, %v617
    %v738 = vpop.permute.xlu0 %737
    %741 = vset.pattern.permute.xlu0 0
    %742 = vperm.xlu0 %741, %v618
    %v743 = vpop.permute.xlu0 %742
    %746 = vset.pattern.permute.xlu0 0
    %747 = vperm.xlu0 %746, %v619
    %v748 = vpop.permute.xlu0 %747
    %751 = vset.pattern.permute.xlu0 0
    %752 = vperm.xlu0 %751, %v620
    %v753 = vpop.permute.xlu0 %752
    %756 = vset.pattern.permute.xlu0 0
    %757 = vperm.xlu0 %756, %v621
    %v758 = vpop.permute.xlu0 %757
    %v761 = vsel %vm142, %v694, 0
    %v764 = vsel %vm142, %v695, 0
    %v767 = vsel %vm142, %v696, 0
    %v770 = vsel %vm142, %v697, 0
    %v773 = vsel %vm142, %v698, 0
    %v776 = vsel %vm142, %v699, 0
    %778 = vmatprep.subr.bf16.mxu0 0
    %779 = vmatpush1.bf16.msra.mxu0 0
    %780 = vmatprep.subr.bf16.mxu0 0
    %781 = vmatpush1.bf16.msra.mxu0 0
    %782 = vmatprep.subr.bf16.mxu0 0
    %783 = vmatpush1.bf16.msra.mxu0 0
    %784 = vmatprep.subr.bf16.mxu0 0
    %785 = vmatpush1.bf16.msra.mxu0 0
    %786 = vmatprep.subr.bf16.mxu0 0
    %787 = vmatpush1.bf16.msra.mxu0 0
    %788 = vmatprep.subr.bf16.mxu0 0
    %789 = vmatpush1.bf16.msra.mxu0 0
    %790 = vmatprep.subr.bf16.mxu0 0
    %791 = vmatpush1.bf16.msra.mxu0 0
    %792 = vmatprep.subr.bf16.mxu0 %v36
    %793 = vmatpush1.bf16.msra.mxu0 %v35
    %794 = vmatprep.subr.bf16.mxu0 0
    %795 = vmatpush2.bf16.msra.mxu0 0
    %796 = vmatprep.subr.bf16.mxu0 0
    %797 = vmatpush2.bf16.msra.mxu0 0
    %798 = vmatprep.subr.bf16.mxu0 0
    %799 = vmatpush2.bf16.msra.mxu0 0
    %800 = vmatprep.subr.bf16.mxu0 0
    %801 = vmatpush2.bf16.msra.mxu0 0
    %802 = vmatprep.subr.bf16.mxu0 0
    %803 = vmatpush2.bf16.msra.mxu0 0
    %804 = vmatprep.subr.bf16.mxu0 0
    %805 = vmatpush2.bf16.msra.mxu0 0
    %806 = vmatprep.subr.bf16.mxu0 0
    %807 = vmatpush2.bf16.msra.mxu0 0
    %808 = vmatprep.subr.bf16.mxu0 0
    %809 = vmatpush2.bf16.msra.mxu0 0
    %810 = vmatprep.mubr.bf16.mxu0 0
    %811 = vmatmul.mubr.bf16.gmra.mxu0 %v761
    %v812 = vpop.f32.mrf.mxu0
    %v813 = vadd.f32 %v703, %v812
    %v814 = vpop.f32.mrf.mxu0
    %v815 = vadd.f32 %v703, %v814
    %v816 = vpop.f32.mrf.mxu0
    %v817 = vadd.f32 %v708, %v816
    %v818 = vpop.f32.mrf.mxu0
    %v819 = vadd.f32 %v708, %v818
    %820 = vmatprep.mubr.bf16.mxu0 0
    %821 = vmatmul.mubr.bf16.gmra.mxu0 %v764
    %v822 = vpop.f32.mrf.mxu0
    %v823 = vadd.f32 %v713, %v822
    %v824 = vpop.f32.mrf.mxu0
    %v825 = vadd.f32 %v713, %v824
    %v826 = vpop.f32.mrf.mxu0
    %v827 = vadd.f32 %v718, %v826
    %v828 = vpop.f32.mrf.mxu0
    %v829 = vadd.f32 %v718, %v828
    %830 = vmatprep.mubr.bf16.mxu0 0
    %831 = vmatmul.mubr.bf16.gmra.mxu0 %v767
    %v832 = vpop.f32.mrf.mxu0
    %v833 = vadd.f32 %v723, %v832
    %v834 = vpop.f32.mrf.mxu0
    %v835 = vadd.f32 %v723, %v834
    %v836 = vpop.f32.mrf.mxu0
    %v837 = vadd.f32 %v728, %v836
    %v838 = vpop.f32.mrf.mxu0
    %v839 = vadd.f32 %v728, %v838
    %840 = vmatprep.mubr.bf16.mxu0 0
    %841 = vmatmul.mubr.bf16.gmra.mxu0 %v770
    %v842 = vpop.f32.mrf.mxu0
    %v843 = vadd.f32 %v733, %v842
    %v844 = vpop.f32.mrf.mxu0
    %v845 = vadd.f32 %v733, %v844
    %v846 = vpop.f32.mrf.mxu0
    %v847 = vadd.f32 %v738, %v846
    %v848 = vpop.f32.mrf.mxu0
    %v849 = vadd.f32 %v738, %v848
    %850 = vmatprep.mubr.bf16.mxu0 0
    %851 = vmatmul.mubr.bf16.gmra.mxu0 %v773
    %v852 = vpop.f32.mrf.mxu0
    %v853 = vadd.f32 %v743, %v852
    %v854 = vpop.f32.mrf.mxu0
    %v855 = vadd.f32 %v743, %v854
    %v856 = vpop.f32.mrf.mxu0
    %v857 = vadd.f32 %v748, %v856
    %v858 = vpop.f32.mrf.mxu0
    %v859 = vadd.f32 %v748, %v858
    %860 = vmatprep.mubr.bf16.mxu0 0
    %861 = vmatmul.mubr.bf16.gmra.mxu0 %v776
    %v862 = vpop.f32.mrf.mxu0
    %v863 = vadd.f32 %v753, %v862
    %v864 = vpop.f32.mrf.mxu0
    %v865 = vadd.f32 %v753, %v864
    %v866 = vpop.f32.mrf.mxu0
    %v867 = vadd.f32 %v758, %v866
    %v868 = vpop.f32.mrf.mxu0
    %v869 = vadd.f32 %v758, %v868
    %870 = vdwg.mxu0
    %871 = vst [vmem:[#allocation2] sm:$0xff] %v813
    %872 = vst [vmem:[#allocation2 + $0x8] sm:$0xff] %v815
    %873 = vst [vmem:[#allocation2 + $0x10] sm:$0xff] %v817
    %874 = vst [vmem:[#allocation2 + $0x18] sm:$0xff] %v819
    %875 = vst [vmem:[#allocation2 + $0x20] sm:$0xff] %v823
    %876 = vst [vmem:[#allocation2 + $0x28] sm:$0xff] %v825
    %877 = vst [vmem:[#allocation2 + $0x30] sm:$0xff] %v827
    %878 = vst [vmem:[#allocation2 + $0x38] sm:$0xff] %v829
    %879 = vst [vmem:[#allocation2 + $0x40] sm:$0xff] %v833
    %880 = vst [vmem:[#allocation2 + $0x48] sm:$0xff] %v835
    %881 = vst [vmem:[#allocation2 + $0x50] sm:$0xff] %v837
    %882 = vst [vmem:[#allocation2 + $0x58] sm:$0xff] %v839
    %883 = vst [vmem:[#allocation2 + $0x60] sm:$0xff] %v843
    %884 = vst [vmem:[#allocation2 + $0x68] sm:$0xff] %v845
    %885 = vst [vmem:[#allocation2 + $0x70] sm:$0xff] %v847
    %886 = vst [vmem:[#allocation2 + $0x78] sm:$0xff] %v849
    %887 = vst [vmem:[#allocation2 + $0x80] sm:$0xff] %v853
    %888 = vst [vmem:[#allocation2 + $0x88] sm:$0xff] %v855
    %889 = vst [vmem:[#allocation2 + $0x90] sm:$0xff] %v857
    %890 = vst [vmem:[#allocation2 + $0x98] sm:$0xff] %v859
    %891 = vst [vmem:[#allocation2 + $0xa0] sm:$0xff] %v863
    %892 = vst [vmem:[#allocation2 + $0xa8] sm:$0xff] %v865
    %893 = vst [vmem:[#allocation2 + $0xb0] sm:$0xff] %v867
    %894 = vst [vmem:[#allocation2 + $0xb8] sm:$0xff] %v869
    %v895 = vld [vmem:[%s45] sm:$0xff]
    %v896 = vld [vmem:[%s45 + $0x8] sm:$0xff]
    %v897 = vld [vmem:[%s45 + $0x10] sm:$0xff]
    %v898 = vld [vmem:[%s45 + $0x18] sm:$0xff]
    %v899 = vpack.c.bf16 %v897, %v895
    %v900 = vpack.c.bf16 %v898, %v896
    %901 = vmatprep.subr.bf16.mxu0 0
    %902 = vmatpush1.bf16.msra.mxu0 0
    %903 = vmatprep.subr.bf16.mxu0 0
    %904 = vmatpush1.bf16.msra.mxu0 0
    %905 = vmatprep.subr.bf16.mxu0 0
    %906 = vmatpush1.bf16.msra.mxu0 0
    %907 = vmatprep.subr.bf16.mxu0 0
    %908 = vmatpush1.bf16.msra.mxu0 0
    %909 = vmatprep.subr.bf16.mxu0 0
    %910 = vmatpush1.bf16.msra.mxu0 0
    %911 = vmatprep.subr.bf16.mxu0 0
    %912 = vmatpush1.bf16.msra.mxu0 0
    %913 = vmatprep.subr.bf16.mxu0 0
    %914 = vmatpush1.bf16.msra.mxu0 0
    %915 = vmatprep.subr.bf16.mxu0 %v900
    %916 = vmatpush1.bf16.msra.mxu0 %v899
    %917 = vmatprep.subr.bf16.mxu0 0
    %918 = vmatpush2.bf16.msra.mxu0 0
    %919 = vmatprep.subr.bf16.mxu0 0
    %920 = vmatpush2.bf16.msra.mxu0 0
    %921 = vmatprep.subr.bf16.mxu0 0
    %922 = vmatpush2.bf16.msra.mxu0 0
    %923 = vmatprep.subr.bf16.mxu0 0
    %924 = vmatpush2.bf16.msra.mxu0 0
    %925 = vmatprep.subr.bf16.mxu0 0
    %926 = vmatpush2.bf16.msra.mxu0 0
    %927 = vmatprep.subr.bf16.mxu0 0
    %928 = vmatpush2.bf16.msra.mxu0 0
    %929 = vmatprep.subr.bf16.mxu0 0
    %930 = vmatpush2.bf16.msra.mxu0 0
    %931 = vmatprep.subr.bf16.mxu0 0
    %932 = vmatpush2.bf16.msra.mxu0 0
    %933 = vmatprep.mubr.bf16.mxu0 0
    %934 = vmatmul.mubr.bf16.gmra.mxu0 %v761
    %v935 = vpop.f32.mrf.mxu0
    %v936 = vadd.f32 %v703, %v935
    %v937 = vpop.f32.mrf.mxu0
    %v938 = vadd.f32 %v703, %v937
    %v939 = vpop.f32.mrf.mxu0
    %v940 = vadd.f32 %v708, %v939
    %v941 = vpop.f32.mrf.mxu0
    %v942 = vadd.f32 %v708, %v941
    %943 = vmatprep.mubr.bf16.mxu0 0
    %944 = vmatmul.mubr.bf16.gmra.mxu0 %v764
    %v945 = vpop.f32.mrf.mxu0
    %v946 = vadd.f32 %v713, %v945
    %v947 = vpop.f32.mrf.mxu0
    %v948 = vadd.f32 %v713, %v947
    %v949 = vpop.f32.mrf.mxu0
    %v950 = vadd.f32 %v718, %v949
    %v951 = vpop.f32.mrf.mxu0
    %v952 = vadd.f32 %v718, %v951
    %953 = vmatprep.mubr.bf16.mxu0 0
    %954 = vmatmul.mubr.bf16.gmra.mxu0 %v767
    %v955 = vpop.f32.mrf.mxu0
    %v956 = vadd.f32 %v723, %v955
    %v957 = vpop.f32.mrf.mxu0
    %v958 = vadd.f32 %v723, %v957
    %v959 = vpop.f32.mrf.mxu0
    %v960 = vadd.f32 %v728, %v959
    %v961 = vpop.f32.mrf.mxu0
    %v962 = vadd.f32 %v728, %v961
    %963 = vmatprep.mubr.bf16.mxu0 0
    %964 = vmatmul.mubr.bf16.gmra.mxu0 %v770
    %v965 = vpop.f32.mrf.mxu0
    %v966 = vadd.f32 %v733, %v965
    %v967 = vpop.f32.mrf.mxu0
    %v968 = vadd.f32 %v733, %v967
    %v969 = vpop.f32.mrf.mxu0
    %v970 = vadd.f32 %v738, %v969
    %v971 = vpop.f32.mrf.mxu0
    %v972 = vadd.f32 %v738, %v971
    %973 = vmatprep.mubr.bf16.mxu0 0
    %974 = vmatmul.mubr.bf16.gmra.mxu0 %v773
    %v975 = vpop.f32.mrf.mxu0
    %v976 = vadd.f32 %v743, %v975
    %v977 = vpop.f32.mrf.mxu0
    %v978 = vadd.f32 %v743, %v977
    %v979 = vpop.f32.mrf.mxu0
    %v980 = vadd.f32 %v748, %v979
    %v981 = vpop.f32.mrf.mxu0
    %v982 = vadd.f32 %v748, %v981
    %983 = vmatprep.mubr.bf16.mxu0 0
    %984 = vmatmul.mubr.bf16.gmra.mxu0 %v776
    %v985 = vpop.f32.mrf.mxu0
    %v986 = vadd.f32 %v753, %v985
    %v987 = vpop.f32.mrf.mxu0
    %v988 = vadd.f32 %v753, %v987
    %v989 = vpop.f32.mrf.mxu0
    %v990 = vadd.f32 %v758, %v989
    %v991 = vpop.f32.mrf.mxu0
    %v992 = vadd.f32 %v758, %v991
    %993 = vdwg.mxu0
    %s994 = scalar_lea.vmem [#allocation2], 192
    %995 = vst [vmem:[%s994] sm:$0xff] %v936
    %996 = vst [vmem:[%s994 + $0x8] sm:$0xff] %v938
    %997 = vst [vmem:[%s994 + $0x10] sm:$0xff] %v940
    %998 = vst [vmem:[%s994 + $0x18] sm:$0xff] %v942
    %999 = vst [vmem:[%s994 + $0x20] sm:$0xff] %v946
    %1000 = vst [vmem:[%s994 + $0x28] sm:$0xff] %v948
    %1001 = vst [vmem:[%s994 + $0x30] sm:$0xff] %v950
    %1002 = vst [vmem:[%s994 + $0x38] sm:$0xff] %v952
    %1003 = vst [vmem:[%s994 + $0x40] sm:$0xff] %v956
    %1004 = vst [vmem:[%s994 + $0x48] sm:$0xff] %v958
    %1005 = vst [vmem:[%s994 + $0x50] sm:$0xff] %v960
    %1006 = vst [vmem:[%s994 + $0x58] sm:$0xff] %v962
    %1007 = vst [vmem:[%s994 + $0x60] sm:$0xff] %v966
    %1008 = vst [vmem:[%s994 + $0x68] sm:$0xff] %v968
    %1009 = vst [vmem:[%s994 + $0x70] sm:$0xff] %v970
    %1010 = vst [vmem:[%s994 + $0x78] sm:$0xff] %v972
    %1011 = vst [vmem:[%s994 + $0x80] sm:$0xff] %v976
    %1012 = vst [vmem:[%s994 + $0x88] sm:$0xff] %v978
    %1013 = vst [vmem:[%s994 + $0x90] sm:$0xff] %v980
    %1014 = vst [vmem:[%s994 + $0x98] sm:$0xff] %v982
    %1015 = vst [vmem:[%s994 + $0xa0] sm:$0xff] %v986
    %1016 = vst [vmem:[%s994 + $0xa8] sm:$0xff] %v988
    %1017 = vst [vmem:[%s994 + $0xb0] sm:$0xff] %v990
    %1018 = vst [vmem:[%s994 + $0xb8] sm:$0xff] %v992
    // Predicated region
    $region18: #{tpu_custom_call.1} parent=1 // pred_check
      _
    $region19: #{tpu_custom_call.1} parent=1 // pred_check_branch
      %1020 = sbr.rel (0) target = $region21
    $region20: #{tpu_custom_call.1} parent=1 // pred_region
      %s1022 = ssub.s32 6144, 6144
      %1023 = vsyncadd [#allocation3], %s1022
      %s1024 = sshll.u32 [#allocation2], 4
      %s1025 = int_to_ptr.vmem [resolvable:$true] %s1024
      %1030 = dma.vmem_to_hbm [thread:$0]  %s1025, 6144, %s4, [#allocation3], 256, 256, 16
    $region21: #{tpu_custom_call.1} parent=1 // pred_fallthru
      _
    // Predicated region
    $region22: #{tpu_custom_call.1} parent=1 // pred_check
      _
    $region23: #{tpu_custom_call.1} parent=1 // pred_check_branch
      %1032 = sbr.rel (0) target = $region25
    $region24: #{tpu_custom_call.1} parent=1 // pred_region
      %1033 = dma.done [#allocation3], 6144
    $region25: #{tpu_custom_call.1} parent=1 // pred_fallthru
      _
    %1034 = vsyncpa [#allocation3], 1

</llo_original>
